<compile_context>
chip_gen: v5e
topology: v5e:2x2
jax: 0.10.0
libtpu: 0.0.40
codegen_flags: <defaults>
</compile_context>

<pallas_src>
import jax
import jax.numpy as jnp
from jax.experimental import pallas as pl
from jax.experimental.pallas import tpu as pltpu


def _copy_kernel(x_ref, o_ref):
    # forward(): return self.mul_tensor -> emit the parameter tile unchanged.
    o_ref[...] = x_ref[...]


# Sublane multiple per element size (f32/i32 -> 8, bf16 -> 16, int8/fp8 -> 32).
_SUBLANE_MULTIPLE = {4: 8, 2: 16, 1: 32}

# Cap one block at 4 MiB: double-buffered input + output <= ~16 MiB VMEM,
# comfortably under default scoped-VMEM limits on v5e / v6e / v7x.
_MAX_BLOCK_BYTES = 4 * 1024 * 1024


def _choose_row_tile(rows: int, cols: int, dtype) -> int:
    itemsize = jnp.dtype(dtype).itemsize
    sub = _SUBLANE_MULTIPLE.get(itemsize, 8)
    row_bytes = max(cols * itemsize, 1)
    cap_rows = max(sub, (_MAX_BLOCK_BYTES // row_bytes) // sub * sub)
    if rows <= cap_rows:
        # Full-extent block along rows is always a legal block shape.
        return rows
    return cap_rows


def learnable_mul_forward(mul_tensor: jax.Array, row_tile: int | None = None) -> jax.Array:
    """Pallas implementation of LearnableMul.forward().

    Returns the parameter tensor unchanged (same shape / dtype).  The output
    buffer is aliased to the parameter buffer (input_output_aliases) and the
    remaining copy is row-tiled so the BlockSpec pipeline overlaps the input
    and output DMAs for large parameters.
    """
    orig_shape = mul_tensor.shape
    # Collapse to 2-D (rows, cols); last dim stays the lane dimension.
    if mul_tensor.ndim == 0:
        x2d = mul_tensor.reshape(1, 1)
    elif mul_tensor.ndim == 1:
        x2d = mul_tensor.reshape(1, orig_shape[0])
    else:
        rows = 1
        for d in orig_shape[:-1]:
            rows *= d
        x2d = mul_tensor.reshape(rows, orig_shape[-1])

    rows, cols = x2d.shape
    itemsize = jnp.dtype(x2d.dtype).itemsize
    sub = _SUBLANE_MULTIPLE.get(itemsize, 8)

    if row_tile is None:
        tr = _choose_row_tile(rows, cols, x2d.dtype)
    else:
        tr = min(row_tile, rows)
    if tr < rows:
        # Sub-row tiles must respect the dtype's sublane multiple.
        tr = max(sub, (tr // sub) * sub)

    grid = (pl.cdiv(rows, tr),)
    # Full lane (last) dimension in every block -> lane-dense, unmasked stores.
    spec = pl.BlockSpec((tr, cols), lambda i: (i, 0))

    out2d = pl.pallas_call(
        _copy_kernel,
        out_shape=jax.ShapeDtypeStruct((rows, cols), x2d.dtype),
        grid=grid,
        in_specs=[spec],
        out_specs=spec,
        # Alias the parameter buffer to the output: no fresh HBM allocation,
        # and (when the caller donates the buffer) no HBM round trip at all.
        input_output_aliases={0: 0},
        compiler_params=pltpu.CompilerParams(
            dimension_semantics=("parallel",),
        ),
    )(x2d)

    return out2d.reshape(orig_shape)


if __name__ == "__main__":
    # Deterministic parameter init, mimicking torch.rand(shape) (uniform [0,1)).
    shape = (512, 128)  # nn.Parameter(torch.rand(shape)); small but multi-block
    key = jax.random.PRNGKey(0)
    mul_tensor = jax.random.uniform(key, shape, dtype=jnp.float32)

    # Keep an independent copy for the check (the kernel output aliases the
    # parameter buffer, so don't rely on re-reading a possibly-donated input).
    expected = jnp.array(mul_tensor, copy=True)

    # row_tile=128 -> grid of 4 steps, exercising the overlapped copy pipeline.
    out = learnable_mul_forward(mul_tensor, row_tile=128)
    out = jax.block_until_ready(out)

    # Semantics check: forward() returns the parameter itself (bit-exact).
    assert out.shape == expected.shape
    assert out.dtype == expected.dtype
    assert bool(jnp.array_equal(out, expected))

    print("KERNEL_OK")
</pallas_src>

<mosaic_0001>
module attributes {stable_mosaic.version = 11 : i64} {
  func.func @_copy_kernel(%arg0: i32, %arg1: memref<128x128xf32, #tpu.memory_space<vmem>>, %arg2: memref<128x128xf32, #tpu.memory_space<vmem>>) attributes {dimension_semantics = [#tpu.dimension_semantics<parallel>], iteration_bounds = array<i64: 4>, scalar_prefetch = 0 : i64, scratch_operands = 0 : i64, tpu.core_type = #tpu.core_type<tc>, window_params = [{transform_indices = @transform_0, window_bounds = array<i64: 128, 128>}, {transform_indices = @transform_1, window_bounds = array<i64: 128, 128>}]} {
    %c0 = arith.constant 0 : index
    %c0_0 = arith.constant 0 : index
    %0 = vector.load %arg1[%c0, %c0_0] : memref<128x128xf32, #tpu.memory_space<vmem>>, vector<128x128xf32>
    %c0_1 = arith.constant 0 : index
    %c0_2 = arith.constant 0 : index
    %1 = vector.load %arg2[%c0_1, %c0_2] : memref<128x128xf32, #tpu.memory_space<vmem>>, vector<128x128xf32>
    tpu.vector_store %arg2[%c0_1, %c0_2], %0 {strides = array<i32>} : memref<128x128xf32, #tpu.memory_space<vmem>>, vector<128x128xf32>,
    return
  }
  func.func @transform_0(%arg0: i32) -> (i32, i32) {
    %c0_i32 = arith.constant 0 : i32
    %c0_i32_0 = arith.constant 0 : i32
    return %arg0, %c0_i32 : i32, i32
  }
  func.func @transform_1(%arg0: i32) -> (i32, i32) {
    %c0_i32 = arith.constant 0 : i32
    %c0_i32_0 = arith.constant 0 : i32
    return %arg0, %c0_i32 : i32, i32
  }
}

</mosaic_0001>

<llo_original>
// kernel: tpu_custom_call.1
$region0: #{tpu_custom_call.1}
  #allocation0 [shape = 'u32[]', space=smem, size = 0x4, offset = 0x4, fixed_abs, tag = 'smem constant byte address 0x4 - core index']
  #allocation1 [shape = 'u32[72,128]{1,0:T(1,128)}', space=vmem, size = 0x9000, scoped, tag = 'internal scratch']
  %s0 = inlined_call_operand.hbm [shape: f32[512,128], index: 0, kind: input, shape index: {}, may-alias: {0,1}]
  %s1 = inlined_call_operand.hbm [shape: f32[512,128], index: 1, kind: output, shape index: {}, may-alias: {0,1}]
  %s2 = sld [smem:[#allocation0]]
  $region41: #{tpu_custom_call.1} parent=0
    _
  %s4 = ssub.s32 1, %s2
  %s5 = scalar_select 0, %s4, %s2
  $region1: #{tpu_custom_call.1} parent=0
    #allocation2 [shape = 'u8[131072]{0}', space=vmem, size = 0x20000, scoped, tag = 'input window, operand 0']
    #allocation3 [shape = 's32[2]{0}', space=sflag, size = 0x8, scoped, tag = 'scoped memory for tpu_custom_call.1']
    #allocation4 [shape = 's32[2]{0}', space=sflag, size = 0x8, scoped, tag = 'scoped memory for tpu_custom_call.1']
    #allocation5 [shape = 'u8[131072]{0}', space=vmem, size = 0x20000, scoped, tag = 'output window, operand 0']
    %6 = vsyncpa [#allocation3], 0
    %s7 = scalar_lea.sflag [#allocation3], 1
    %8 = vsyncpa %s7, 0
    %9 = vsyncpa [#allocation4], 0
    %s10 = scalar_lea.sflag [#allocation4], 1
    %11 = vsyncpa %s10, 0
    loop: start=0, step=1, limit=6
    $region2: #{tpu_custom_call.1} parent=1 // loop_pre_header
      _
    $region3: #{tpu_custom_call.1} parent=1 // loop_header
      %s13 = sphi 0, %s17
      %p14 = scmp.ge.s32.totalorder %s13, 6
      %s23 = sphi 0, %s25
      %s26 = sphi 0, %s23
      %s27 = sphi 0, %s26
      %s43 = sphi 0, %s27
      %s49 = sphi 0, %s51
      %s52 = sphi 0, %s49
      %s53 = sphi 0, %s52
      %s69 = sphi 0, %s53
    $region4: #{tpu_custom_call.1} parent=1 // loop_header_branch
      %16 = sbr.rel (%p14) target = $region8
    $region5: #{tpu_custom_call.1} parent=1 // loop_body
      %s18 = ssub.s32 %s13, 1
      %s19 = ssub.s32 %s13, 2
      %s20 = sadd.s32 %s13, 1
      %s21 = ssub.s32 %s13, %s20
      %p22 = scmp.eq.s32.totalorder %s21, 0
      %s24 = sadd.s32 %s23, 1
      %s25 = scalar_select %p22, %s23, %s24
      %p28 = pneg %p22
      %p29 = scmp.eq.s32.totalorder %s13, 3
      %p30 = por %p28, %p29
      %p31 = scmp.ne.s32.totalorder %s23, %s26
      %p32 = scmp.eq.s32.totalorder %s13, 0
      %p33 = por %p31, %p32
      %p34 = scmp.ne.s32.totalorder %s23, %s26
      %p35 = scmp.eq.s32.totalorder %s18, 3
      %p36 = por %p34, %p35
      %p37 = scmp.ne.s32.totalorder %s26, %s27
      %p38 = scmp.eq.s32.totalorder %s18, 0
      %p39 = por %p37, %p38
      %p40 = scmp.ne.s32.totalorder %s26, %s27
      %p41 = scmp.eq.s32.totalorder %s19, 3
      %p42 = por %p40, %p41
      %p44 = scmp.ne.s32.totalorder %s27, %s43
      %p45 = scmp.eq.s32.totalorder %s19, 0
      %p46 = por %p44, %p45
      %s47 = ssub.s32 %s13, %s20
      %p48 = scmp.eq.s32.totalorder %s47, 0
      %s50 = sadd.s32 %s49, 1
      %s51 = scalar_select %p48, %s49, %s50
      %p54 = pneg %p48
      %p55 = scmp.eq.s32.totalorder %s13, 3
      %p56 = por %p54, %p55
      %p57 = scmp.ne.s32.totalorder %s49, %s52
      %p58 = scmp.eq.s32.totalorder %s13, 0
      %p59 = por %p57, %p58
      %p60 = scmp.ne.s32.totalorder %s49, %s52
      %p61 = scmp.eq.s32.totalorder %s18, 3
      %p62 = por %p60, %p61
      %p63 = scmp.ne.s32.totalorder %s52, %s53
      %p64 = scmp.eq.s32.totalorder %s18, 0
      %p65 = por %p63, %p64
      %p66 = scmp.ne.s32.totalorder %s52, %s53
      %p67 = scmp.eq.s32.totalorder %s19, 3
      %p68 = por %p66, %p67
      %p70 = scmp.ne.s32.totalorder %s53, %s69
      %p71 = scmp.eq.s32.totalorder %s19, 0
      %p72 = por %p70, %p71
      %p73 = scmp.le.s32.totalorder 1, %s13
      %p74 = scmp.lt.s32.totalorder %s13, 5
      %p75 = pnand %p73, %p74
      %p76 = pneg %p75
      // Predicated region
      $region9: #{tpu_custom_call.1} parent=5 // pred_check
        _
      $region10: #{tpu_custom_call.1} parent=5 // pred_check_branch
        %78 = sbr.rel (%p75) target = $region12
      $region11: #{tpu_custom_call.1} parent=5 // pred_region
        %s79 = ssub.s32 %s13, 1
      $region12: #{tpu_custom_call.1} parent=5 // pred_fallthru
        _
      %p80 = scmp.lt.s32.totalorder %s13, 4
      // Predicated region
      $region13: #{tpu_custom_call.1} parent=5 // pred_check
        %p81 = pneg %p80
      $region14: #{tpu_custom_call.1} parent=5 // pred_check_branch
        %83 = sbr.rel (%p81) target = $region16
      $region15: #{tpu_custom_call.1} parent=5 // pred_region
        // Predicated region
        $region17: #{tpu_custom_call.1} parent=15 // pred_check
          %p84 = pneg %p33
        $region18: #{tpu_custom_call.1} parent=15 // pred_check_branch
          %86 = sbr.rel (%p84) target = $region20
        $region19: #{tpu_custom_call.1} parent=15 // pred_region
          %s87 = sand.u32 %s23, 1
          %s88 = scalar_lea.sflag [#allocation3], %s87
          %s89 = sand.u32 %s23, 1
          %s90 = smul.addr %s89, 128
          %s91 = scalar_lea.vmem [#allocation2], %s90
          %s92 = smul.u32 16, %s13
          %94 = vsyncadd %s88, 0
          %s95 = smul.addr %s92, 8
          %s96 = scalar_lea.hbm %s0, %s95
          %s97 = sshll.u32 %s96, 4
          %s98 = int_to_ptr.hbm [resolvable:$true] %s97
          %s99 = sshll.u32 %s91, 4
          %s100 = int_to_ptr.vmem [resolvable:$true] %s99
          %105 = dma.hbm_to_vmem [thread:$0]  %s98, 2048, %s100, %s88, 128, 128, 8
        $region20: #{tpu_custom_call.1} parent=15 // pred_fallthru
          _
      $region16: #{tpu_custom_call.1} parent=5 // pred_fallthru
        _
      %p106 = scmp.le.s32.totalorder 1, %s13
      %p107 = scmp.lt.s32.totalorder %s13, 5
      %p108 = pnand %p106, %p107
      %p109 = pneg %p108
      // Predicated region
      $region21: #{tpu_custom_call.1} parent=5 // pred_check
        _
      $region22: #{tpu_custom_call.1} parent=5 // pred_check_branch
        %111 = sbr.rel (%p108) target = $region24
      $region23: #{tpu_custom_call.1} parent=5 // pred_region
        %s112 = ssub.s32 %s13, 1
        %s113 = sand.u32 %s26, 1
        %s114 = scalar_lea.sflag [#allocation3], %s113
        %s115 = sand.u32 %s26, 1
        %s116 = smul.addr %s115, 128
        %s117 = scalar_lea.vmem [#allocation2], %s116
        // Predicated region
        $region25: #{tpu_custom_call.1} parent=23 // pred_check
          %p118 = pneg %p39
        $region26: #{tpu_custom_call.1} parent=23 // pred_check_branch
          %120 = sbr.rel (%p118) target = $region28
        $region27: #{tpu_custom_call.1} parent=23 // pred_region
          %122 = dma.done %s114, 2048
        $region28: #{tpu_custom_call.1} parent=23 // pred_fallthru
          _
        %s123 = sand.u32 %s26, 1
        %s124 = scalar_lea.sflag [#allocation3], %s123
        %s125 = sand.u32 %s26, 1
        %s126 = smul.addr %s125, 128
        %s127 = scalar_lea.vmem [#allocation2], %s126
        %p128 = pneg %p39
        %p129 = pneg %p36
        %p130 = pneg %p65
        %p131 = pneg %p62
        %s132 = sand.u32 %s52, 1
        %s133 = scalar_lea.sflag [#allocation4], %s132
        %s134 = sand.u32 %s52, 1
        %s135 = smul.addr %s134, 128
        %s136 = scalar_lea.vmem [#allocation5], %s135
        %s137 = smul.u32 16, %s18
        %s138 = smul.u32 16, %s18
        %v139 = vld [vmem:[%s117] sm:$0xff]
        %v140 = vld [vmem:[%s117 + $0x8] sm:$0xff]
        %v141 = vld [vmem:[%s117 + $0x10] sm:$0xff]
        %v142 = vld [vmem:[%s117 + $0x18] sm:$0xff]
        %v143 = vld [vmem:[%s117 + $0x20] sm:$0xff]
        %v144 = vld [vmem:[%s117 + $0x28] sm:$0xff]
        %v145 = vld [vmem:[%s117 + $0x30] sm:$0xff]
        %v146 = vld [vmem:[%s117 + $0x38] sm:$0xff]
        %v147 = vld [vmem:[%s117 + $0x40] sm:$0xff]
        %v148 = vld [vmem:[%s117 + $0x48] sm:$0xff]
        %v149 = vld [vmem:[%s117 + $0x50] sm:$0xff]
        %v150 = vld [vmem:[%s117 + $0x58] sm:$0xff]
        %v151 = vld [vmem:[%s117 + $0x60] sm:$0xff]
        %v152 = vld [vmem:[%s117 + $0x68] sm:$0xff]
        %v153 = vld [vmem:[%s117 + $0x70] sm:$0xff]
        %v154 = vld [vmem:[%s117 + $0x78] sm:$0xff]
        %155 = vst [vmem:[%s136] sm:$0xff] %v139
        %156 = vst [vmem:[%s136 + $0x8] sm:$0xff] %v140
        %157 = vst [vmem:[%s136 + $0x10] sm:$0xff] %v141
        %158 = vst [vmem:[%s136 + $0x18] sm:$0xff] %v142
        %159 = vst [vmem:[%s136 + $0x20] sm:$0xff] %v143
        %160 = vst [vmem:[%s136 + $0x28] sm:$0xff] %v144
        %161 = vst [vmem:[%s136 + $0x30] sm:$0xff] %v145
        %162 = vst [vmem:[%s136 + $0x38] sm:$0xff] %v146
        %163 = vst [vmem:[%s136 + $0x40] sm:$0xff] %v147
        %164 = vst [vmem:[%s136 + $0x48] sm:$0xff] %v148
        %165 = vst [vmem:[%s136 + $0x50] sm:$0xff] %v149
        %166 = vst [vmem:[%s136 + $0x58] sm:$0xff] %v150
        %167 = vst [vmem:[%s136 + $0x60] sm:$0xff] %v151
        %168 = vst [vmem:[%s136 + $0x68] sm:$0xff] %v152
        %169 = vst [vmem:[%s136 + $0x70] sm:$0xff] %v153
        %170 = vst [vmem:[%s136 + $0x78] sm:$0xff] %v154
        %s171 = sand.u32 %s52, 1
        %s172 = scalar_lea.sflag [#allocation4], %s171
        %s173 = sand.u32 %s52, 1
        %s174 = smul.addr %s173, 128
        %s175 = scalar_lea.vmem [#allocation5], %s174
        // Predicated region
        $region29: #{tpu_custom_call.1} parent=23 // pred_check
          %p176 = pneg %p62
        $region30: #{tpu_custom_call.1} parent=23 // pred_check_branch
          %178 = sbr.rel (%p176) target = $region32
        $region31: #{tpu_custom_call.1} parent=23 // pred_region
          %s179 = smul.u32 16, %s18
          %181 = vsyncadd %s172, 0
          %s182 = smul.addr %s179, 8
          %s183 = scalar_lea.hbm %s1, %s182
          %s184 = sshll.u32 %s175, 4
          %s185 = int_to_ptr.vmem [resolvable:$true] %s184
          %s186 = sshll.u32 %s183, 4
          %s187 = int_to_ptr.hbm [resolvable:$true] %s186
          %192 = dma.vmem_to_hbm [thread:$0]  %s185, 2048, %s187, %s172, 128, 128, 8
        $region32: #{tpu_custom_call.1} parent=23 // pred_fallthru
          _
      $region24: #{tpu_custom_call.1} parent=5 // pred_fallthru
        _
      %p193 = scmp.le.s32.totalorder 2, %s13
      // Predicated region
      $region33: #{tpu_custom_call.1} parent=5 // pred_check
        %p194 = pneg %p193
      $region34: #{tpu_custom_call.1} parent=5 // pred_check_branch
        %196 = sbr.rel (%p194) target = $region36
      $region35: #{tpu_custom_call.1} parent=5 // pred_region
        %s197 = ssub.s32 %s13, 2
        // Predicated region
        $region37: #{tpu_custom_call.1} parent=35 // pred_check
          %p198 = pneg %p68
        $region38: #{tpu_custom_call.1} parent=35 // pred_check_branch
          %200 = sbr.rel (%p198) target = $region40
        $region39: #{tpu_custom_call.1} parent=35 // pred_region
          %s201 = sand.u32 %s53, 1
          %s202 = scalar_lea.sflag [#allocation4], %s201
          %s203 = sand.u32 %s53, 1
          %s204 = smul.addr %s203, 128
          %s205 = scalar_lea.vmem [#allocation5], %s204
          %207 = dma.done %s202, 2048
        $region40: #{tpu_custom_call.1} parent=35 // pred_fallthru
          _
      $region36: #{tpu_custom_call.1} parent=5 // pred_fallthru
        _
    $region6: #{tpu_custom_call.1} parent=1 // loop_footer
      %s17 = sadd.s32 1, %s13
    $region7: #{tpu_custom_call.1} parent=1 // loop_footer_branch
      %12 = sbr.rel target = $region3
    $region8: #{tpu_custom_call.1} parent=1 // loop_exit
      _
    %208 = vsyncpa [#allocation3], 1
    %s209 = scalar_lea.sflag [#allocation3], 1
    %210 = vsyncpa %s209, 1
    %211 = vsyncpa [#allocation4], 1
    %s212 = scalar_lea.sflag [#allocation4], 1
    %213 = vsyncpa %s212, 1

</llo_original>
